<compile_context>
chip_gen: v5e
topology: v5e:2x2
jax: 0.10.0
libtpu: 0.0.40
codegen_flags: <defaults>
</compile_context>

<pallas_src>
import functools

import jax
import jax.numpy as jnp
from jax.experimental import pallas as pl
from jax.experimental.pallas import tpu as pltpu

N_OBS = 7
N_OBS_PAD = 8          # pad the 7-wide contraction to 8 (zero row contributes nothing)
N_HEADS = 2            # fused heads: row 0 = num_vacancies, row 1 = bargaining_power
H1, H2, H3 = 128, 64, 32

NORMALIZATION_VECTOR = jnp.asarray(
    [300.0, 300.0, 300.0, 100.0, 100.0, 1000.0, 1000.0], dtype=jnp.float32
)


def _round_up(n, m):
    return ((n + m - 1) // m) * m


def _actor_kernel(x_ref, w1_ref, b1_ref, w2_ref, b2_ref, w3_ref, b3_ref,
                  wh_ref, bh_ref, out_ref):
    """Feature-major trunk: all activations are (features, tile_b)."""
    cdt = w1_ref.dtype   # MXU operand dtype: bf16 (default) or f32
    adt = b1_ref.dtype   # inter-layer elementwise dtype: f32 (safe) or bf16 (v6e/v7x)

    x = x_ref[...].astype(cdt)                                   # (8, TB)

    h = jnp.dot(w1_ref[...], x, preferred_element_type=jnp.float32)
    h = jnp.maximum(h.astype(adt) + b1_ref[...], 0.0)            # (128, TB)

    h = jnp.dot(w2_ref[...], h.astype(cdt), preferred_element_type=jnp.float32)
    h = jnp.maximum(h.astype(adt) + b2_ref[...], 0.0)            # (64, TB)

    h = jnp.dot(w3_ref[...], h.astype(cdt), preferred_element_type=jnp.float32)
    h = jnp.maximum(h.astype(adt) + b3_ref[...], 0.0)            # (32, TB)

    # Fused heads: one 2x32 @ 32xTB matmul (N = tile_b on the MXU), one sigmoid,
    # one lane-dense (2, TB) store.
    z = jnp.dot(wh_ref[...], h.astype(cdt), preferred_element_type=jnp.float32)
    out_ref[...] = jax.nn.sigmoid(z + bh_ref[...].astype(jnp.float32))


def prepare_params(params, *, matmul_dtype=jnp.bfloat16, act_dtype=jnp.float32):
    """One-time algebraic prep: fold 1/norm into W1, pad K 7->8, fuse the two heads,
    and pre-transpose everything for the feature-major kernel layout.

    matmul_dtype: MXU operand dtype (bf16 default on all generations; f32 = exact path).
    act_dtype:    inter-layer bias-add/ReLU dtype (f32 safe everywhere; bf16 halves
                  intermediate VMEM traffic on v6e/v7x).
    """
    w1 = params["w1"] / NORMALIZATION_VECTOR[:, None]                      # (7, 128)
    w1 = jnp.concatenate([w1, jnp.zeros((N_OBS_PAD - N_OBS, H1), jnp.float32)],
                         axis=0)                                           # (8, 128)
    wh = jnp.concatenate([params["wv"], params["wb"]], axis=1)             # (32, 2)
    bh = jnp.concatenate([params["bv"], params["bb"]], axis=1)             # (1, 2)
    return dict(
        w1t=w1.T.astype(matmul_dtype),                # (128, 8)
        b1t=params["b1"].T.astype(act_dtype),         # (128, 1)
        w2t=params["w2"].T.astype(matmul_dtype),      # (64, 128)
        b2t=params["b2"].T.astype(act_dtype),         # (64, 1)
        w3t=params["w3"].T.astype(matmul_dtype),      # (32, 64)
        b3t=params["b3"].T.astype(act_dtype),         # (32, 1)
        wht=wh.T.astype(matmul_dtype),                # (2, 32)
        bht=bh.T.astype(jnp.float32),                 # (2, 1)  final add/sigmoid in f32
    )


@functools.partial(jax.jit, static_argnames=("tile_b",))
def actor_network_forward(x, prepared, *, tile_b=2048):
    """x: (B, N_OBS). Returns (num_vacancies, bargaining_power), each (B, 1) float32."""
    B = x.shape[0]

    # Batch is the lane axis now: tile_b must be a multiple of 128.
    tile_b = max(128, _round_up(tile_b, 128))
    # Keep >= ~4 grid steps when the batch allows it so v7x's 2 TensorCores both
    # get work (neutral on v5e/v6e); for small B this collapses to one 128-tile.
    tile_b = min(tile_b, max(128, _round_up(pl.cdiv(B, 4), 128)))
    num_tiles = pl.cdiv(B, tile_b)   # ragged last block: clipped reads, masked writes

    # The single wrapper pass over x: feature-major transpose + pad 7 -> 8.
    # Same HBM cost as a plain copy, but every kernel-side DMA row is now dense.
    xt = jnp.concatenate(
        [x.astype(jnp.float32).T,
         jnp.zeros((N_OBS_PAD - N_OBS, B), jnp.float32)], axis=0)          # (8, B)

    def const(shape):
        return pl.BlockSpec(shape, lambda i: (0,) * len(shape))   # VMEM-resident

    in_specs = [
        pl.BlockSpec((N_OBS_PAD, tile_b), lambda i: (0, i)),      # x tile (8, TB)
        const((H1, N_OBS_PAD)), const((H1, 1)),
        const((H2, H1)), const((H2, 1)),
        const((H3, H2)), const((H3, 1)),
        const((N_HEADS, H3)), const((N_HEADS, 1)),
    ]
    out_spec = pl.BlockSpec((N_HEADS, tile_b), lambda i: (0, i))  # lane-dense output

    flops = 2 * B * (N_OBS_PAD * H1 + H1 * H2 + H2 * H3 + H3 * N_HEADS)
    weight_bytes = sum(int(v.size) * v.dtype.itemsize for v in prepared.values())
    cost = pl.CostEstimate(
        flops=flops,
        transcendentals=N_HEADS * B,                              # two sigmoids per row
        bytes_accessed=B * (N_OBS_PAD + N_HEADS) * 4 + weight_bytes,
    )

    out = pl.pallas_call(
        _actor_kernel,
        out_shape=jax.ShapeDtypeStruct((N_HEADS, B), jnp.float32),
        grid=(num_tiles,),
        in_specs=in_specs,
        out_specs=out_spec,
        compiler_params=pltpu.CompilerParams(
            dimension_semantics=("parallel",),        # shard batch tiles over TCs (v7x)
            vmem_limit_bytes=32 * 1024 * 1024,        # explicit; ample headroom all gens
        ),
        cost_estimate=cost,
    )(xt, prepared["w1t"], prepared["b1t"], prepared["w2t"], prepared["b2t"],
      prepared["w3t"], prepared["b3t"], prepared["wht"], prepared["bht"])

    num_vacancies = out[0].reshape(B, 1)
    bargaining_power = out[1].reshape(B, 1)
    return num_vacancies, bargaining_power


def init_params(key):
    """Deterministic init. PyTorch Linear weight is (out, in); we store (in, out)."""
    def linear(k, fan_in, fan_out):
        kw, kb = jax.random.split(k)
        bound = 1.0 / jnp.sqrt(fan_in)
        w = jax.random.uniform(kw, (fan_in, fan_out), jnp.float32, -bound, bound)
        b = jax.random.uniform(kb, (1, fan_out), jnp.float32, -bound, bound)
        return w, b

    k1, k2, k3, k4, k5 = jax.random.split(key, 5)
    w1, b1 = linear(k1, N_OBS, H1)
    w2, b2 = linear(k2, H1, H2)
    w3, b3 = linear(k3, H2, H3)
    wv, bv = linear(k4, H3, 1)
    wb, bb = linear(k5, H3, 1)
    return dict(w1=w1, b1=b1, w2=w2, b2=b2, w3=w3, b3=b3,
                wv=wv, bv=bv, wb=wb, bb=bb)


def _reference_forward(x, params):
    """Pure-JAX reference (original, un-folded, batch-major parameterization)."""
    h = x / NORMALIZATION_VECTOR
    h = jnp.maximum(h @ params["w1"] + params["b1"], 0.0)
    h = jnp.maximum(h @ params["w2"] + params["b2"], 0.0)
    h = jnp.maximum(h @ params["w3"] + params["b3"], 0.0)
    nv = jax.nn.sigmoid(h @ params["wv"] + params["bv"])
    bp = jax.nn.sigmoid(h @ params["wb"] + params["bb"])
    return nv, bp


if __name__ == "__main__":
    key = jax.random.PRNGKey(0)
    kp, kx, kx2 = jax.random.split(key, 3)

    params = init_params(kp)
    prepared_f32 = prepare_params(params, matmul_dtype=jnp.float32)   # exact-math path
    prepared_bf16 = prepare_params(params)                            # default: bf16 MXU operands
    prepared_bf16_act = prepare_params(params, act_dtype=jnp.bfloat16)  # bf16 acts (v6e/v7x)

    # Small demo batch (module semantics: (B, 7) raw observations).
    B = 8
    x = jax.random.uniform(kx, (B, N_OBS), jnp.float32, 0.0, 1.0) * NORMALIZATION_VECTOR

    nv, bp = actor_network_forward(x, prepared_f32)
    jax.block_until_ready((nv, bp))
    nv_ref, bp_ref = _reference_forward(x, params)
    assert nv.shape == (B, 1) and bp.shape == (B, 1)
    # Folding 1/norm into W1 perturbs rounding slightly; keep a tight-but-safe tol.
    assert jnp.allclose(nv, nv_ref, atol=1e-5, rtol=1e-4)
    assert jnp.allclose(bp, bp_ref, atol=1e-5, rtol=1e-4)

    # Multi-tile grid + ragged last block (B not a multiple of tile_b, no padding pass).
    B2 = 1000
    x2 = jax.random.uniform(kx2, (B2, N_OBS), jnp.float32, 0.0, 1.0) * NORMALIZATION_VECTOR
    nv2, bp2 = actor_network_forward(x2, prepared_f32, tile_b=256)
    jax.block_until_ready((nv2, bp2))
    nv2_ref, bp2_ref = _reference_forward(x2, params)
    assert nv2.shape == (B2, 1) and bp2.shape == (B2, 1)
    assert jnp.allclose(nv2, nv2_ref, atol=1e-5, rtol=1e-4)
    assert jnp.allclose(bp2, bp2_ref, atol=1e-5, rtol=1e-4)

    # Default path: bf16 MXU operands, f32 accumulation/elementwise (all generations).
    nv3, bp3 = actor_network_forward(x2, prepared_bf16)
    jax.block_until_ready((nv3, bp3))
    assert jnp.allclose(nv3, nv2_ref, atol=5e-2, rtol=5e-2)
    assert jnp.allclose(bp3, bp2_ref, atol=5e-2, rtol=5e-2)

    # bf16 inter-layer activations (intended for v6e/v7x; still lowers on v5e).
    nv4, bp4 = actor_network_forward(x2, prepared_bf16_act)
    jax.block_until_ready((nv4, bp4))
    assert jnp.allclose(nv4, nv2_ref, atol=5e-2, rtol=5e-2)
    assert jnp.allclose(bp4, bp2_ref, atol=5e-2, rtol=5e-2)

    print("KERNEL_OK")
</pallas_src>

<mosaic_0001>
module attributes {stable_mosaic.version = 11 : i64} {
  func.func @_actor_kernel(%arg0: i32, %arg1: memref<8x128xf32, #tpu.memory_space<vmem>>, %arg2: memref<128x8xf32, #tpu.memory_space<vmem>>, %arg3: memref<128x1xf32, #tpu.memory_space<vmem>>, %arg4: memref<64x128xf32, #tpu.memory_space<vmem>>, %arg5: memref<64x1xf32, #tpu.memory_space<vmem>>, %arg6: memref<32x64xf32, #tpu.memory_space<vmem>>, %arg7: memref<32x1xf32, #tpu.memory_space<vmem>>, %arg8: memref<2x32xf32, #tpu.memory_space<vmem>>, %arg9: memref<2x1xf32, #tpu.memory_space<vmem>>, %arg10: memref<2x128xf32, #tpu.memory_space<vmem>>) attributes {dimension_semantics = [#tpu.dimension_semantics<parallel>], iteration_bounds = array<i64: 1>, scalar_prefetch = 0 : i64, scratch_operands = 0 : i64, tpu.core_type = #tpu.core_type<tc>, window_params = [{transform_indices = @transform_0, window_bounds = array<i64: 8, 128>}, {pipeline_mode = #tpu.pipeline_mode<synchronous>, transform_indices = @transform_1, window_bounds = array<i64: 128, 8>}, {pipeline_mode = #tpu.pipeline_mode<synchronous>, transform_indices = @transform_2, window_bounds = array<i64: 128, 1>}, {pipeline_mode = #tpu.pipeline_mode<synchronous>, transform_indices = @transform_3, window_bounds = array<i64: 64, 128>}, {pipeline_mode = #tpu.pipeline_mode<synchronous>, transform_indices = @transform_4, window_bounds = array<i64: 64, 1>}, {pipeline_mode = #tpu.pipeline_mode<synchronous>, transform_indices = @transform_5, window_bounds = array<i64: 32, 64>}, {pipeline_mode = #tpu.pipeline_mode<synchronous>, transform_indices = @transform_6, window_bounds = array<i64: 32, 1>}, {pipeline_mode = #tpu.pipeline_mode<synchronous>, transform_indices = @transform_7, window_bounds = array<i64: 2, 32>}, {pipeline_mode = #tpu.pipeline_mode<synchronous>, transform_indices = @transform_8, window_bounds = array<i64: 2, 1>}, {transform_indices = @transform_9, window_bounds = array<i64: 2, 128>}]} {
    %c0 = arith.constant 0 : index
    %c0_0 = arith.constant 0 : index
    %0 = vector.load %arg1[%c0, %c0_0] : memref<8x128xf32, #tpu.memory_space<vmem>>, vector<8x128xf32>
    %c0_1 = arith.constant 0 : index
    %c0_2 = arith.constant 0 : index
    %1 = vector.load %arg2[%c0_1, %c0_2] : memref<128x8xf32, #tpu.memory_space<vmem>>, vector<128x8xf32>
    %cst = arith.constant dense<0.000000e+00> : vector<128x128xf32>
    %2 = tpu.matmul %1, %0, %cst {dimension_numbers = #tpu.dot_dimension_numbers<[1], [0], [0], [1], [0, 0, 1, 1], [], []>} : vector<128x8xf32>, vector<8x128xf32>, vector<128x128xf32> -> vector<128x128xf32>
    %c0_3 = arith.constant 0 : index
    %c0_4 = arith.constant 0 : index
    %3 = vector.load %arg3[%c0_3, %c0_4] : memref<128x1xf32, #tpu.memory_space<vmem>>, vector<128x1xf32>
    %4 = vector.broadcast %3 : vector<128x1xf32> to vector<128x128xf32>
    %5 = arith.addf %2, %4 : vector<128x128xf32>
    %cst_5 = arith.constant 0.000000e+00 : f32
    %6 = vector.broadcast %cst_5 : f32 to vector<128x128xf32>
    %7 = arith.maximumf %5, %6 : vector<128x128xf32>
    %c0_6 = arith.constant 0 : index
    %c0_7 = arith.constant 0 : index
    %8 = vector.load %arg4[%c0_6, %c0_7] : memref<64x128xf32, #tpu.memory_space<vmem>>, vector<64x128xf32>
    %cst_8 = arith.constant dense<0.000000e+00> : vector<64x128xf32>
    %9 = tpu.matmul %8, %7, %cst_8 {dimension_numbers = #tpu.dot_dimension_numbers<[1], [0], [0], [1], [0, 0, 1, 1], [], []>} : vector<64x128xf32>, vector<128x128xf32>, vector<64x128xf32> -> vector<64x128xf32>
    %c0_9 = arith.constant 0 : index
    %c0_10 = arith.constant 0 : index
    %10 = vector.load %arg5[%c0_9, %c0_10] : memref<64x1xf32, #tpu.memory_space<vmem>>, vector<64x1xf32>
    %11 = vector.broadcast %10 : vector<64x1xf32> to vector<64x128xf32>
    %12 = arith.addf %9, %11 : vector<64x128xf32>
    %cst_11 = arith.constant 0.000000e+00 : f32
    %13 = vector.broadcast %cst_11 : f32 to vector<64x128xf32>
    %14 = arith.maximumf %12, %13 : vector<64x128xf32>
    %c0_12 = arith.constant 0 : index
    %c0_13 = arith.constant 0 : index
    %15 = vector.load %arg6[%c0_12, %c0_13] : memref<32x64xf32, #tpu.memory_space<vmem>>, vector<32x64xf32>
    %cst_14 = arith.constant dense<0.000000e+00> : vector<32x128xf32>
    %16 = tpu.matmul %15, %14, %cst_14 {dimension_numbers = #tpu.dot_dimension_numbers<[1], [0], [0], [1], [0, 0, 1, 1], [], []>} : vector<32x64xf32>, vector<64x128xf32>, vector<32x128xf32> -> vector<32x128xf32>
    %c0_15 = arith.constant 0 : index
    %c0_16 = arith.constant 0 : index
    %17 = vector.load %arg7[%c0_15, %c0_16] : memref<32x1xf32, #tpu.memory_space<vmem>>, vector<32x1xf32>
    %18 = vector.broadcast %17 : vector<32x1xf32> to vector<32x128xf32>
    %19 = arith.addf %16, %18 : vector<32x128xf32>
    %cst_17 = arith.constant 0.000000e+00 : f32
    %20 = vector.broadcast %cst_17 : f32 to vector<32x128xf32>
    %21 = arith.maximumf %19, %20 : vector<32x128xf32>
    %c0_18 = arith.constant 0 : index
    %c0_19 = arith.constant 0 : index
    %22 = vector.load %arg8[%c0_18, %c0_19] : memref<2x32xf32, #tpu.memory_space<vmem>>, vector<2x32xf32>
    %cst_20 = arith.constant dense<0.000000e+00> : vector<2x128xf32>
    %23 = tpu.matmul %22, %21, %cst_20 {dimension_numbers = #tpu.dot_dimension_numbers<[1], [0], [0], [1], [0, 0, 1, 1], [], []>} : vector<2x32xf32>, vector<32x128xf32>, vector<2x128xf32> -> vector<2x128xf32>
    %c0_21 = arith.constant 0 : index
    %c0_22 = arith.constant 0 : index
    %24 = vector.load %arg9[%c0_21, %c0_22] : memref<2x1xf32, #tpu.memory_space<vmem>>, vector<2x1xf32>
    %25 = vector.broadcast %24 : vector<2x1xf32> to vector<2x128xf32>
    %26 = arith.addf %23, %25 : vector<2x128xf32>
    %27 = arith.negf %26 : vector<2x128xf32>
    %28 = math.exp %27 : vector<2x128xf32>
    %cst_23 = arith.constant 1.000000e+00 : f32
    %29 = vector.broadcast %cst_23 : f32 to vector<2x128xf32>
    %30 = arith.addf %29, %28 : vector<2x128xf32>
    %31 = arith.divf %29, %30 : vector<2x128xf32>
    %c0_24 = arith.constant 0 : index
    %c0_25 = arith.constant 0 : index
    %32 = vector.load %arg10[%c0_24, %c0_25] : memref<2x128xf32, #tpu.memory_space<vmem>>, vector<2x128xf32>
    tpu.vector_store %arg10[%c0_24, %c0_25], %31 {strides = array<i32>} : memref<2x128xf32, #tpu.memory_space<vmem>>, vector<2x128xf32>,
    return
  }
  func.func @transform_0(%arg0: i32) -> (i32, i32) {
    %c0_i32 = arith.constant 0 : i32
    %c0_i32_0 = arith.constant 0 : i32
    return %c0_i32, %arg0 : i32, i32
  }
  func.func @transform_1(%arg0: i32) -> (i32, i32) {
    %c0_i32 = arith.constant 0 : i32
    %c0_i32_0 = arith.constant 0 : i32
    %c0_i32_1 = arith.constant 0 : i32
    return %c0_i32, %c0_i32_0 : i32, i32
  }
  func.func @transform_2(%arg0: i32) -> (i32, i32) {
    %c0_i32 = arith.constant 0 : i32
    %c0_i32_0 = arith.constant 0 : i32
    %c0_i32_1 = arith.constant 0 : i32
    return %c0_i32, %c0_i32_0 : i32, i32
  }
  func.func @transform_3(%arg0: i32) -> (i32, i32) {
    %c0_i32 = arith.constant 0 : i32
    %c0_i32_0 = arith.constant 0 : i32
    %c0_i32_1 = arith.constant 0 : i32
    return %c0_i32, %c0_i32_0 : i32, i32
  }
  func.func @transform_4(%arg0: i32) -> (i32, i32) {
    %c0_i32 = arith.constant 0 : i32
    %c0_i32_0 = arith.constant 0 : i32
    %c0_i32_1 = arith.constant 0 : i32
    return %c0_i32, %c0_i32_0 : i32, i32
  }
  func.func @transform_5(%arg0: i32) -> (i32, i32) {
    %c0_i32 = arith.constant 0 : i32
    %c0_i32_0 = arith.constant 0 : i32
    %c0_i32_1 = arith.constant 0 : i32
    return %c0_i32, %c0_i32_0 : i32, i32
  }
  func.func @transform_6(%arg0: i32) -> (i32, i32) {
    %c0_i32 = arith.constant 0 : i32
    %c0_i32_0 = arith.constant 0 : i32
    %c0_i32_1 = arith.constant 0 : i32
    return %c0_i32, %c0_i32_0 : i32, i32
  }
  func.func @transform_7(%arg0: i32) -> (i32, i32) {
    %c0_i32 = arith.constant 0 : i32
    %c0_i32_0 = arith.constant 0 : i32
    %c0_i32_1 = arith.constant 0 : i32
    return %c0_i32, %c0_i32_0 : i32, i32
  }
  func.func @transform_8(%arg0: i32) -> (i32, i32) {
    %c0_i32 = arith.constant 0 : i32
    %c0_i32_0 = arith.constant 0 : i32
    %c0_i32_1 = arith.constant 0 : i32
    return %c0_i32, %c0_i32_0 : i32, i32
  }
  func.func @transform_9(%arg0: i32) -> (i32, i32) {
    %c0_i32 = arith.constant 0 : i32
    %c0_i32_0 = arith.constant 0 : i32
    return %c0_i32, %arg0 : i32, i32
  }
}

</mosaic_0001>

<llo_original>
// kernel: actor_network_forward.1
$region0: #{actor_network_forward.1}
  #allocation0 [shape = 'u32[]', space=smem, size = 0x4, offset = 0x4, fixed_abs, tag = 'smem constant byte address 0x4 - core index']
  #allocation1 [shape = 'u32[72,128]{1,0:T(1,128)}', space=vmem, size = 0x9000, scoped, tag = 'internal scratch']
  %s0 = inlined_call_operand.vmem [shape: f32[8,8], index: 0, kind: input, shape index: {}]
  %s1 = inlined_call_operand.vmem [shape: f32[128,8], index: 1, kind: input, shape index: {}]
  %s2 = inlined_call_operand.vmem [shape: f32[128,1], index: 2, kind: input, shape index: {}]
  %s3 = inlined_call_operand.vmem [shape: f32[64,128], index: 3, kind: input, shape index: {}]
  %s4 = inlined_call_operand.vmem [shape: f32[64,1], index: 4, kind: input, shape index: {}]
  %s5 = inlined_call_operand.vmem [shape: f32[32,64], index: 5, kind: input, shape index: {}]
  %s6 = inlined_call_operand.vmem [shape: f32[32,1], index: 6, kind: input, shape index: {}]
  %s7 = inlined_call_operand.vmem [shape: f32[2,32], index: 7, kind: input, shape index: {}]
  %s8 = inlined_call_operand.vmem [shape: f32[2,1], index: 8, kind: input, shape index: {}]
  %s9 = inlined_call_operand.vmem [shape: f32[2,8], index: 9, kind: output, shape index: {}]
  %s10 = sld [smem:[#allocation0]]
  $region46: #{actor_network_forward.1} parent=0
    _
  %s12 = ssub.s32 1, %s10
  %s13 = scalar_select 0, %s12, %s10
  // Predicated region
  $region2: #{actor_network_forward.1} parent=0 // pred_check
    _
  $region3: #{actor_network_forward.1} parent=0 // pred_check_branch
    %15 = sbr.rel (0) target = $region5
  $region4: #{actor_network_forward.1} parent=0 // pred_region
    _
  $region5: #{actor_network_forward.1} parent=0 // pred_fallthru
    _
  // Predicated region
  $region6: #{actor_network_forward.1} parent=0 // pred_check
    _
  $region7: #{actor_network_forward.1} parent=0 // pred_check_branch
    %17 = sbr.rel (0) target = $region9
  $region8: #{actor_network_forward.1} parent=0 // pred_region
    _
  $region9: #{actor_network_forward.1} parent=0 // pred_fallthru
    _
  // Predicated region
  $region10: #{actor_network_forward.1} parent=0 // pred_check
    _
  $region11: #{actor_network_forward.1} parent=0 // pred_check_branch
    %19 = sbr.rel (0) target = $region13
  $region12: #{actor_network_forward.1} parent=0 // pred_region
    _
  $region13: #{actor_network_forward.1} parent=0 // pred_fallthru
    _
  // Predicated region
  $region14: #{actor_network_forward.1} parent=0 // pred_check
    _
  $region15: #{actor_network_forward.1} parent=0 // pred_check_branch
    %21 = sbr.rel (0) target = $region17
  $region16: #{actor_network_forward.1} parent=0 // pred_region
    _
  $region17: #{actor_network_forward.1} parent=0 // pred_fallthru
    _
  // Predicated region
  $region18: #{actor_network_forward.1} parent=0 // pred_check
    _
  $region19: #{actor_network_forward.1} parent=0 // pred_check_branch
    %23 = sbr.rel (0) target = $region21
  $region20: #{actor_network_forward.1} parent=0 // pred_region
    _
  $region21: #{actor_network_forward.1} parent=0 // pred_fallthru
    _
  // Predicated region
  $region22: #{actor_network_forward.1} parent=0 // pred_check
    _
  $region23: #{actor_network_forward.1} parent=0 // pred_check_branch
    %25 = sbr.rel (0) target = $region25
  $region24: #{actor_network_forward.1} parent=0 // pred_region
    _
  $region25: #{actor_network_forward.1} parent=0 // pred_fallthru
    _
  // Predicated region
  $region26: #{actor_network_forward.1} parent=0 // pred_check
    _
  $region27: #{actor_network_forward.1} parent=0 // pred_check_branch
    %27 = sbr.rel (0) target = $region29
  $region28: #{actor_network_forward.1} parent=0 // pred_region
    _
  $region29: #{actor_network_forward.1} parent=0 // pred_fallthru
    _
  // Predicated region
  $region30: #{actor_network_forward.1} parent=0 // pred_check
    _
  $region31: #{actor_network_forward.1} parent=0 // pred_check_branch
    %29 = sbr.rel (0) target = $region33
  $region32: #{actor_network_forward.1} parent=0 // pred_region
    _
  $region33: #{actor_network_forward.1} parent=0 // pred_fallthru
    _
  // Predicated region
  $region34: #{actor_network_forward.1} parent=0 // pred_check
    _
  $region35: #{actor_network_forward.1} parent=0 // pred_check_branch
    %31 = sbr.rel (0) target = $region37
  $region36: #{actor_network_forward.1} parent=0 // pred_region
    _
  $region37: #{actor_network_forward.1} parent=0 // pred_fallthru
    _
  %v32 = vld [vmem:[%s0] sm:$0xff]
  %v33 = vld [vmem:[%s1] sm:$0xff]
  %v34 = vld [vmem:[%s1 + $0x8] sm:$0xff]
  %v35 = vld [vmem:[%s1 + $0x10] sm:$0xff]
  %v36 = vld [vmem:[%s1 + $0x18] sm:$0xff]
  %v37 = vld [vmem:[%s1 + $0x20] sm:$0xff]
  %v38 = vld [vmem:[%s1 + $0x28] sm:$0xff]
  %v39 = vld [vmem:[%s1 + $0x30] sm:$0xff]
  %v40 = vld [vmem:[%s1 + $0x38] sm:$0xff]
  %v41 = vld [vmem:[%s1 + $0x40] sm:$0xff]
  %v42 = vld [vmem:[%s1 + $0x48] sm:$0xff]
  %v43 = vld [vmem:[%s1 + $0x50] sm:$0xff]
  %v44 = vld [vmem:[%s1 + $0x58] sm:$0xff]
  %v45 = vld [vmem:[%s1 + $0x60] sm:$0xff]
  %v46 = vld [vmem:[%s1 + $0x68] sm:$0xff]
  %v47 = vld [vmem:[%s1 + $0x70] sm:$0xff]
  %v48 = vld [vmem:[%s1 + $0x78] sm:$0xff]
  %v49 = vld [vmem:[%s2] sm:$0xff]
  %v50 = vld [vmem:[%s2 + $0x8] sm:$0xff]
  %v51 = vld [vmem:[%s2 + $0x10] sm:$0xff]
  %v52 = vld [vmem:[%s2 + $0x18] sm:$0xff]
  %v53 = vld [vmem:[%s2 + $0x20] sm:$0xff]
  %v54 = vld [vmem:[%s2 + $0x28] sm:$0xff]
  %v55 = vld [vmem:[%s2 + $0x30] sm:$0xff]
  %v56 = vld [vmem:[%s2 + $0x38] sm:$0xff]
  %v57 = vld [vmem:[%s2 + $0x40] sm:$0xff]
  %v58 = vld [vmem:[%s2 + $0x48] sm:$0xff]
  %v59 = vld [vmem:[%s2 + $0x50] sm:$0xff]
  %v60 = vld [vmem:[%s2 + $0x58] sm:$0xff]
  %v61 = vld [vmem:[%s2 + $0x60] sm:$0xff]
  %v62 = vld [vmem:[%s2 + $0x68] sm:$0xff]
  %v63 = vld [vmem:[%s2 + $0x70] sm:$0xff]
  %v64 = vld [vmem:[%s2 + $0x78] sm:$0xff]
  %66 = vset.pattern.permute.xlu0 0
  %67 = vperm.xlu0 %66, %v49
  %v68 = vpop.permute.xlu0 %67
  %71 = vset.pattern.permute.xlu0 0
  %72 = vperm.xlu0 %71, %v50
  %v73 = vpop.permute.xlu0 %72
  %76 = vset.pattern.permute.xlu0 0
  %77 = vperm.xlu0 %76, %v51
  %v78 = vpop.permute.xlu0 %77
  %81 = vset.pattern.permute.xlu0 0
  %82 = vperm.xlu0 %81, %v52
  %v83 = vpop.permute.xlu0 %82
  %86 = vset.pattern.permute.xlu0 0
  %87 = vperm.xlu0 %86, %v53
  %v88 = vpop.permute.xlu0 %87
  %91 = vset.pattern.permute.xlu0 0
  %92 = vperm.xlu0 %91, %v54
  %v93 = vpop.permute.xlu0 %92
  %96 = vset.pattern.permute.xlu0 0
  %97 = vperm.xlu0 %96, %v55
  %v98 = vpop.permute.xlu0 %97
  %101 = vset.pattern.permute.xlu0 0
  %102 = vperm.xlu0 %101, %v56
  %v103 = vpop.permute.xlu0 %102
  %106 = vset.pattern.permute.xlu0 0
  %107 = vperm.xlu0 %106, %v57
  %v108 = vpop.permute.xlu0 %107
  %111 = vset.pattern.permute.xlu0 0
  %112 = vperm.xlu0 %111, %v58
  %v113 = vpop.permute.xlu0 %112
  %116 = vset.pattern.permute.xlu0 0
  %117 = vperm.xlu0 %116, %v59
  %v118 = vpop.permute.xlu0 %117
  %121 = vset.pattern.permute.xlu0 0
  %122 = vperm.xlu0 %121, %v60
  %v123 = vpop.permute.xlu0 %122
  %126 = vset.pattern.permute.xlu0 0
  %127 = vperm.xlu0 %126, %v61
  %v128 = vpop.permute.xlu0 %127
  %131 = vset.pattern.permute.xlu0 0
  %132 = vperm.xlu0 %131, %v62
  %v133 = vpop.permute.xlu0 %132
  %136 = vset.pattern.permute.xlu0 0
  %137 = vperm.xlu0 %136, %v63
  %v138 = vpop.permute.xlu0 %137
  %141 = vset.pattern.permute.xlu0 0
  %142 = vperm.xlu0 %141, %v64
  %v143 = vpop.permute.xlu0 %142
  %vm145 = vcmask 64512
  %v147 = vsel %vm145, %v33, 0
  %v150 = vsel %vm145, %v34, 0
  %v153 = vsel %vm145, %v35, 0
  %v156 = vsel %vm145, %v36, 0
  %v159 = vsel %vm145, %v37, 0
  %v162 = vsel %vm145, %v38, 0
  %v165 = vsel %vm145, %v39, 0
  %v168 = vsel %vm145, %v40, 0
  %v171 = vsel %vm145, %v41, 0
  %v174 = vsel %vm145, %v42, 0
  %v177 = vsel %vm145, %v43, 0
  %v180 = vsel %vm145, %v44, 0
  %v183 = vsel %vm145, %v45, 0
  %v186 = vsel %vm145, %v46, 0
  %v189 = vsel %vm145, %v47, 0
  %v192 = vsel %vm145, %v48, 0
  %194 = vmatpush.msra.mxu0 0.0
  %195 = vmatpush.msra.mxu0 0.0
  %196 = vmatpush.msra.mxu0 0.0
  %197 = vmatpush.msra.mxu0 0.0
  %198 = vmatpush.msra.mxu0 0.0
  %199 = vmatpush.msra.mxu0 0.0
  %200 = vmatpush.msra.mxu0 0.0
  %201 = vmatpush.msra.mxu0 0.0
  %202 = vmatpush.msra.mxu0 0.0
  %203 = vmatpush.msra.mxu0 0.0
  %204 = vmatpush.msra.mxu0 0.0
  %205 = vmatpush.msra.mxu0 0.0
  %206 = vmatpush.msra.mxu0 0.0
  %207 = vmatpush.msra.mxu0 0.0
  %208 = vmatpush.msra.mxu0 0.0
  %209 = vmatpush.msra.mxu0 %v32
  %210 = vmatmul.f32.gmra.mxu0 %v147
  %v211 = vpop.f32.mrf.mxu0
  %v212 = vadd.f32 %v68, %v211
  %213 = vmatmul.f32.gmra.mxu0 %v150
  %v214 = vpop.f32.mrf.mxu0
  %v215 = vadd.f32 %v73, %v214
  %216 = vmatmul.f32.gmra.mxu0 %v153
  %v217 = vpop.f32.mrf.mxu0
  %v218 = vadd.f32 %v78, %v217
  %219 = vmatmul.f32.gmra.mxu0 %v156
  %v220 = vpop.f32.mrf.mxu0
  %v221 = vadd.f32 %v83, %v220
  %222 = vmatmul.f32.gmra.mxu0 %v159
  %v223 = vpop.f32.mrf.mxu0
  %v224 = vadd.f32 %v88, %v223
  %225 = vmatmul.f32.gmra.mxu0 %v162
  %v226 = vpop.f32.mrf.mxu0
  %v227 = vadd.f32 %v93, %v226
  %228 = vmatmul.f32.gmra.mxu0 %v165
  %v229 = vpop.f32.mrf.mxu0
  %v230 = vadd.f32 %v98, %v229
  %231 = vmatmul.f32.gmra.mxu0 %v168
  %v232 = vpop.f32.mrf.mxu0
  %v233 = vadd.f32 %v103, %v232
  %234 = vmatmul.f32.gmra.mxu0 %v171
  %v235 = vpop.f32.mrf.mxu0
  %v236 = vadd.f32 %v108, %v235
  %237 = vmatmul.f32.gmra.mxu0 %v174
  %v238 = vpop.f32.mrf.mxu0
  %v239 = vadd.f32 %v113, %v238
  %240 = vmatmul.f32.gmra.mxu0 %v177
  %v241 = vpop.f32.mrf.mxu0
  %v242 = vadd.f32 %v118, %v241
  %243 = vmatmul.f32.gmra.mxu0 %v180
  %v244 = vpop.f32.mrf.mxu0
  %v245 = vadd.f32 %v123, %v244
  %246 = vmatmul.f32.gmra.mxu0 %v183
  %v247 = vpop.f32.mrf.mxu0
  %v248 = vadd.f32 %v128, %v247
  %249 = vmatmul.f32.gmra.mxu0 %v186
  %v250 = vpop.f32.mrf.mxu0
  %v251 = vadd.f32 %v133, %v250
  %252 = vmatmul.f32.gmra.mxu0 %v189
  %v253 = vpop.f32.mrf.mxu0
  %v254 = vadd.f32 %v138, %v253
  %255 = vmatmul.f32.gmra.mxu0 %v192
  %v256 = vpop.f32.mrf.mxu0
  %v257 = vadd.f32 %v143, %v256
  %258 = vdwg.mxu0
  %v259 = vmax.f32 %v212, 0.0
  %v260 = vmax.f32 %v215, 0.0
  %v261 = vmax.f32 %v218, 0.0
  %v262 = vmax.f32 %v221, 0.0
  %v263 = vmax.f32 %v224, 0.0
  %v264 = vmax.f32 %v227, 0.0
  %v265 = vmax.f32 %v230, 0.0
  %v266 = vmax.f32 %v233, 0.0
  %v267 = vmax.f32 %v236, 0.0
  %v268 = vmax.f32 %v239, 0.0
  %v269 = vmax.f32 %v242, 0.0
  %v270 = vmax.f32 %v245, 0.0
  %v271 = vmax.f32 %v248, 0.0
  %v272 = vmax.f32 %v251, 0.0
  %v273 = vmax.f32 %v254, 0.0
  %v274 = vmax.f32 %v257, 0.0
  %v275 = vld [vmem:[%s3] sm:$0xff]
  %v276 = vld [vmem:[%s3 + $0x8] sm:$0xff]
  %v277 = vld [vmem:[%s3 + $0x10] sm:$0xff]
  %v278 = vld [vmem:[%s3 + $0x18] sm:$0xff]
  %v279 = vld [vmem:[%s3 + $0x20] sm:$0xff]
  %v280 = vld [vmem:[%s3 + $0x28] sm:$0xff]
  %v281 = vld [vmem:[%s3 + $0x30] sm:$0xff]
  %v282 = vld [vmem:[%s3 + $0x38] sm:$0xff]
  %v283 = vld [vmem:[%s4] sm:$0xff]
  %v284 = vld [vmem:[%s4 + $0x8] sm:$0xff]
  %v285 = vld [vmem:[%s4 + $0x10] sm:$0xff]
  %v286 = vld [vmem:[%s4 + $0x18] sm:$0xff]
  %v287 = vld [vmem:[%s4 + $0x20] sm:$0xff]
  %v288 = vld [vmem:[%s4 + $0x28] sm:$0xff]
  %v289 = vld [vmem:[%s4 + $0x30] sm:$0xff]
  %v290 = vld [vmem:[%s4 + $0x38] sm:$0xff]
  %292 = vset.pattern.permute.xlu0 0
  %293 = vperm.xlu0 %292, %v283
  %v294 = vpop.permute.xlu0 %293
  %297 = vset.pattern.permute.xlu0 0
  %298 = vperm.xlu0 %297, %v284
  %v299 = vpop.permute.xlu0 %298
  %302 = vset.pattern.permute.xlu0 0
  %303 = vperm.xlu0 %302, %v285
  %v304 = vpop.permute.xlu0 %303
  %307 = vset.pattern.permute.xlu0 0
  %308 = vperm.xlu0 %307, %v286
  %v309 = vpop.permute.xlu0 %308
  %312 = vset.pattern.permute.xlu0 0
  %313 = vperm.xlu0 %312, %v287
  %v314 = vpop.permute.xlu0 %313
  %317 = vset.pattern.permute.xlu0 0
  %318 = vperm.xlu0 %317, %v288
  %v319 = vpop.permute.xlu0 %318
  %322 = vset.pattern.permute.xlu0 0
  %323 = vperm.xlu0 %322, %v289
  %v324 = vpop.permute.xlu0 %323
  %327 = vset.pattern.permute.xlu0 0
  %328 = vperm.xlu0 %327, %v290
  %v329 = vpop.permute.xlu0 %328
  %331 = vmatpush.msra.mxu0 %v274
  %332 = vmatpush.msra.mxu0 %v273
  %333 = vmatpush.msra.mxu0 %v272
  %334 = vmatpush.msra.mxu0 %v271
  %335 = vmatpush.msra.mxu0 %v270
  %336 = vmatpush.msra.mxu0 %v269
  %337 = vmatpush.msra.mxu0 %v268
  %338 = vmatpush.msra.mxu0 %v267
  %339 = vmatpush.msra.mxu0 %v266
  %340 = vmatpush.msra.mxu0 %v265
  %341 = vmatpush.msra.mxu0 %v264
  %342 = vmatpush.msra.mxu0 %v263
  %343 = vmatpush.msra.mxu0 %v262
  %344 = vmatpush.msra.mxu0 %v261
  %345 = vmatpush.msra.mxu0 %v260
  %346 = vmatpush.msra.mxu0 %v259
  %347 = vmatmul.f32.gmra.mxu0 %v275
  %v348 = vpop.f32.mrf.mxu0
  %v349 = vadd.f32 %v294, %v348
  %350 = vmatmul.f32.gmra.mxu0 %v276
  %v351 = vpop.f32.mrf.mxu0
  %v352 = vadd.f32 %v299, %v351
  %353 = vmatmul.f32.gmra.mxu0 %v277
  %v354 = vpop.f32.mrf.mxu0
  %v355 = vadd.f32 %v304, %v354
  %356 = vmatmul.f32.gmra.mxu0 %v278
  %v357 = vpop.f32.mrf.mxu0
  %v358 = vadd.f32 %v309, %v357
  %359 = vmatmul.f32.gmra.mxu0 %v279
  %v360 = vpop.f32.mrf.mxu0
  %v361 = vadd.f32 %v314, %v360
  %362 = vmatmul.f32.gmra.mxu0 %v280
  %v363 = vpop.f32.mrf.mxu0
  %v364 = vadd.f32 %v319, %v363
  %365 = vmatmul.f32.gmra.mxu0 %v281
  %v366 = vpop.f32.mrf.mxu0
  %v367 = vadd.f32 %v324, %v366
  %368 = vmatmul.f32.gmra.mxu0 %v282
  %v369 = vpop.f32.mrf.mxu0
  %v370 = vadd.f32 %v329, %v369
  %371 = vdwg.mxu0
  %v372 = vmax.f32 %v349, 0.0
  %v373 = vmax.f32 %v352, 0.0
  %v374 = vmax.f32 %v355, 0.0
  %v375 = vmax.f32 %v358, 0.0
  %v376 = vmax.f32 %v361, 0.0
  %v377 = vmax.f32 %v364, 0.0
  %v378 = vmax.f32 %v367, 0.0
  %v379 = vmax.f32 %v370, 0.0
  %v380 = vld [vmem:[%s5] sm:$0xff]
  %v381 = vld [vmem:[%s5 + $0x8] sm:$0xff]
  %v382 = vld [vmem:[%s5 + $0x10] sm:$0xff]
  %v383 = vld [vmem:[%s5 + $0x18] sm:$0xff]
  %v384 = vld [vmem:[%s6] sm:$0xff]
  %v385 = vld [vmem:[%s6 + $0x8] sm:$0xff]
  %v386 = vld [vmem:[%s6 + $0x10] sm:$0xff]
  %v387 = vld [vmem:[%s6 + $0x18] sm:$0xff]
  %389 = vset.pattern.permute.xlu0 0
  %390 = vperm.xlu0 %389, %v384
  %v391 = vpop.permute.xlu0 %390
  %394 = vset.pattern.permute.xlu0 0
  %395 = vperm.xlu0 %394, %v385
  %v396 = vpop.permute.xlu0 %395
  %399 = vset.pattern.permute.xlu0 0
  %400 = vperm.xlu0 %399, %v386
  %v401 = vpop.permute.xlu0 %400
  %404 = vset.pattern.permute.xlu0 0
  %405 = vperm.xlu0 %404, %v387
  %v406 = vpop.permute.xlu0 %405
  %vm408 = vcmask 523264
  %v410 = vsel %vm408, %v380, 0
  %v413 = vsel %vm408, %v381, 0
  %v416 = vsel %vm408, %v382, 0
  %v419 = vsel %vm408, %v383, 0
  %421 = vmatpush.msra.mxu0 0.0
  %422 = vmatpush.msra.mxu0 0.0
  %423 = vmatpush.msra.mxu0 0.0
  %424 = vmatpush.msra.mxu0 0.0
  %425 = vmatpush.msra.mxu0 0.0
  %426 = vmatpush.msra.mxu0 0.0
  %427 = vmatpush.msra.mxu0 0.0
  %428 = vmatpush.msra.mxu0 0.0
  %429 = vmatpush.msra.mxu0 %v379
  %430 = vmatpush.msra.mxu0 %v378
  %431 = vmatpush.msra.mxu0 %v377
  %432 = vmatpush.msra.mxu0 %v376
  %433 = vmatpush.msra.mxu0 %v375
  %434 = vmatpush.msra.mxu0 %v374
  %435 = vmatpush.msra.mxu0 %v373
  %436 = vmatpush.msra.mxu0 %v372
  %437 = vmatmul.f32.gmra.mxu0 %v410
  %v438 = vpop.f32.mrf.mxu0
  %v439 = vadd.f32 %v391, %v438
  %440 = vmatmul.f32.gmra.mxu0 %v413
  %v441 = vpop.f32.mrf.mxu0
  %v442 = vadd.f32 %v396, %v441
  %443 = vmatmul.f32.gmra.mxu0 %v416
  %v444 = vpop.f32.mrf.mxu0
  %v445 = vadd.f32 %v401, %v444
  %446 = vmatmul.f32.gmra.mxu0 %v419
  %v447 = vpop.f32.mrf.mxu0
  %v448 = vadd.f32 %v406, %v447
  %449 = vdwg.mxu0
  %v450 = vmax.f32 %v439, 0.0
  %v451 = vmax.f32 %v442, 0.0
  %v452 = vmax.f32 %v445, 0.0
  %v453 = vmax.f32 %v448, 0.0
  %v454 = vld [vmem:[%s7] sm:$0x3]
  %v455 = vld [vmem:[%s8] sm:$0x3]
  %457 = vset.pattern.permute.xlu0 0
  %458 = vperm.xlu0 %457, %v455
  %v459 = vpop.permute.xlu0 %458
  %vm461 = vcmask 261120
  %v463 = vsel %vm461, %v454, 0
  %465 = vmatpush.msra.mxu0 0.0
  %466 = vmatpush.msra.mxu0 0.0
  %467 = vmatpush.msra.mxu0 0.0
  %468 = vmatpush.msra.mxu0 0.0
  %469 = vmatpush.msra.mxu0 0.0
  %470 = vmatpush.msra.mxu0 0.0
  %471 = vmatpush.msra.mxu0 0.0
  %472 = vmatpush.msra.mxu0 0.0
  %473 = vmatpush.msra.mxu0 0.0
  %474 = vmatpush.msra.mxu0 0.0
  %475 = vmatpush.msra.mxu0 0.0
  %476 = vmatpush.msra.mxu0 0.0
  %477 = vmatpush.msra.mxu0 %v453
  %478 = vmatpush.msra.mxu0 %v452
  %479 = vmatpush.msra.mxu0 %v451
  %480 = vmatpush.msra.mxu0 %v450
  %481 = vmatmul.f32.gmra.mxu0 %v463
  %v482 = vpop.f32.mrf.mxu0
  %v483 = vadd.f32 %v459, %v482
  %484 = vdwg.mxu0
  %v485 = vxor.u32 %v483, 2147483648
  %v486 = vmul.f32 %v485, 1.442695
  %v487 = vpow.pop %v486
  %v488 = vadd.f32 %v487, 1.0
  %v489 = vrcp.pop %v488
  %v490 = vmul.f32 %v488, %v489
  %v491 = vsub.f32 1.0, %v490
  %v492 = vmul.f32 %v489, %v491
  %v493 = vadd.f32 %v489, %v492
  %vm494 = vweird.f32 %v488
  %vm495 = vweird.f32 %v489
  %vm496 = vmor %vm494, %vm495
  %v497 = vsel %vm496, %v489, %v493
  %v498 = vand.u32 2147483647, %v488
  %vm499 = vcmp.eq.f32.partialorder %v498, 8.507059e+37
  %v500 = vand.u32 %v488, 2147483648
  %v501 = vor.u32 1.1754944e-38, %v500
  %v502 = vsel %vm499, %v501, %v497
  %v503 = vmul.f32 1.0, %v502
  %504 = vst [vmem:[%s9] sm:$0x3] %v503
  // Predicated region
  $region38: #{actor_network_forward.1} parent=0 // pred_check
    _
  $region39: #{actor_network_forward.1} parent=0 // pred_check_branch
    %506 = sbr.rel (0) target = $region41
  $region40: #{actor_network_forward.1} parent=0 // pred_region
    _
  $region41: #{actor_network_forward.1} parent=0 // pred_fallthru
    _
  // Predicated region
  $region42: #{actor_network_forward.1} parent=0 // pred_check
    _
  $region43: #{actor_network_forward.1} parent=0 // pred_check_branch
    %508 = sbr.rel (0) target = $region45
  $region44: #{actor_network_forward.1} parent=0 // pred_region
    _
  $region45: #{actor_network_forward.1} parent=0 // pred_fallthru
    _

</llo_original>
